<compile_context>
chip_gen: v7x
topology: tpu7x:2x2x1
jax: 0.10.0
libtpu: 0.0.40
codegen_flags: <defaults>
</compile_context>

<pallas_src>
import functools

import numpy as np
import jax
import jax.numpy as jnp
from jax.experimental import pallas as pl
from jax.experimental.pallas import tpu as pltpu


# ----------------------------- config ------------------------------------
CONFIG = dict(
    num_layers=3,
    in_channels=8,
    out_channels=8,
    kernel_size=3,
    tgt_token_rate=2,
    seq_len=8,          # pooled length T = tgt_token_rate * seq_len = 16
)
BATCH = 2
IN_LEN = 40              # raw input length L (deliberately not divisible by T)


# ----------------- one-time constant construction (init path) -------------
def make_adaptive_pool_matrix(L, T):
    """(L, T) matrix M with x(C, L) @ M == AdaptiveAvgPool1d(T)(x) (PyTorch)."""
    m = np.zeros((L, T), dtype=np.float32)
    for i in range(T):
        start = (i * L) // T
        end = -(-((i + 1) * L) // T)          # ceil((i+1)*L/T)
        m[start:end, i] = 1.0 / (end - start)
    return m


def build_const_slab(pool_mat, params, batch, lanes):
    """Pack every constant operand into ONE f32 slab of shape (rows, lanes).

    rows [0, B*L)        : block-diagonal adaptive-pool matrix (cols [0, B*T))
    next nl*2*Co rows    : per-layer fused causal+gate conv weights, the K taps
                           stacked along columns, bias in column K*Ci
                           (it multiplies an all-ones row built in-kernel)
    next nl*2*Ci rows    : per-layer fused residual+skip 1x1 weights,
                           bias in column Co
    """
    cw, cb, gw, gb, rw, rb, sw, sb = [np.asarray(p, np.float32) for p in params]
    nl, K, Co, Ci = cw.shape
    L, T = pool_mat.shape
    bt = batch * T
    assert bt <= lanes and (K + 1) * Ci <= lanes and 2 * Co <= lanes

    rows = batch * L + nl * 2 * Co + nl * 2 * Ci
    slab = np.zeros((rows, lanes), np.float32)

    # adaptive pooling, block-diagonal over the batch segments of the lane axis
    slab[:batch * L, :bt] = np.kron(np.eye(batch, dtype=np.float32), pool_mat)

    cg_off = batch * L
    for l in range(nl):
        r = cg_off + l * 2 * Co
        for j in range(K):
            slab[r:r + Co, j * Ci:(j + 1) * Ci] = cw[l, j]
            slab[r + Co:r + 2 * Co, j * Ci:(j + 1) * Ci] = gw[l, j]
        slab[r:r + Co, K * Ci] = cb[l, :, 0]
        slab[r + Co:r + 2 * Co, K * Ci] = gb[l, :, 0]

    rs_off = cg_off + nl * 2 * Co
    for l in range(nl):
        r = rs_off + l * 2 * Ci
        slab[r:r + Ci, :Co] = rw[l]
        slab[r + Ci:r + 2 * Ci, :Co] = sw[l]
        slab[r:r + Ci, Co] = rb[l, :, 0]
        slab[r + Ci:r + 2 * Ci, Co] = sb[l, :, 0]

    return jnp.asarray(slab)


# ------------------------------ kernel ------------------------------------
def wavenet_kernel(x_ref, const_ref, out_ref, *, num_layers, kernel_size,
                   c_in, c_out, seq_t, batch, in_len):
    lanes = out_ref.shape[1]                 # padded time axis (>= B*T, %128)
    bl = batch * in_len
    two_co, two_ci = 2 * c_out, 2 * c_in
    cg_w = (kernel_size + 1) * c_in          # K taps + ones block
    rs_w = 2 * c_out                         # gated + ones block
    cg_off = bl
    rs_off = bl + num_layers * two_co

    # Adaptive average pooling: ONE matmul against the block-diagonal pool
    # matrix (batch segments packed along the lane axis never mix).
    h = jnp.dot(x_ref[...], const_ref[0:bl, :],
                preferred_element_type=jnp.float32)              # (Ci, lanes)

    # Loop-invariant constants (hoisted: built once, reused by every layer).
    lane_t = jax.lax.broadcasted_iota(jnp.int32, (c_in, lanes), 1) % seq_t
    ones_ci = jnp.ones((c_in, lanes), jnp.float32)
    ones_co = jnp.ones((c_out, lanes), jnp.float32)
    skip = jnp.zeros((c_in, lanes), jnp.float32)

    for layer in range(num_layers):
        dilation = 2 ** layer
        # Causal taps: lane roll (XLU) + mask of the wrapped lanes (VPU); the
        # mask also guarantees no leakage between the per-batch lane segments.
        taps = []
        for j in range(kernel_size):
            shift = (kernel_size - 1 - j) * dilation
            if shift == 0:
                taps.append(h)
            else:
                rolled = pltpu.roll(h, shift, 1)     # lane t <- lane (t-shift)
                taps.append(jnp.where(lane_t < shift, 0.0, rolled))
        # Filter+gate conv over all taps (+ bias): ONE matmul per layer.
        h_aug = jnp.concatenate(taps + [ones_ci], axis=0)        # (cg_w, lanes)
        w_cg = const_ref[cg_off + layer * two_co:
                         cg_off + (layer + 1) * two_co, 0:cg_w]  # (2Co, cg_w)
        acc = jnp.dot(w_cg, h_aug, preferred_element_type=jnp.float32)
        gated = jnp.tanh(acc[:c_out]) * jax.nn.sigmoid(acc[c_out:])

        # Fused residual + skip 1x1 convs (+ biases): ONE matmul per layer.
        g_aug = jnp.concatenate([gated, ones_co], axis=0)        # (rs_w, lanes)
        w_rs = const_ref[rs_off + layer * two_ci:
                         rs_off + (layer + 1) * two_ci, 0:rs_w]  # (2Ci, rs_w)
        rs = jnp.dot(w_rs, g_aug, preferred_element_type=jnp.float32)
        h = h + rs[:c_in]
        skip = skip + rs[c_in:]

    out_ref[...] = skip.astype(out_ref.dtype)


# ------------------------------ wrapper -----------------------------------
def make_wavenet_forward(num_layers, kernel_size, c_out, seq_t, lanes):
    @jax.jit
    def forward(x, const_slab):
        B, Ci, L = x.shape
        # (B, Ci, L) -> (Ci, B*L): batch folded into the lane axis (fuses
        # with the pallas_call under jit; no per-call constant construction).
        x2 = jnp.transpose(x, (1, 0, 2)).reshape(Ci, B * L)
        kernel = functools.partial(
            wavenet_kernel, num_layers=num_layers, kernel_size=kernel_size,
            c_in=Ci, c_out=c_out, seq_t=seq_t, batch=B, in_len=L)
        out_pad = pl.pallas_call(
            kernel,
            out_shape=jax.ShapeDtypeStruct((Ci, lanes), x.dtype),
            in_specs=[pl.BlockSpec(memory_space=pltpu.MemorySpace.VMEM),
                      pl.BlockSpec(memory_space=pltpu.MemorySpace.VMEM)],
            out_specs=pl.BlockSpec(memory_space=pltpu.MemorySpace.VMEM),
        )(x2, const_slab)
        # drop the lane padding and restore PyTorch NCL layout (B, Ci, T)
        out2 = out_pad[:, :B * seq_t]
        return jnp.transpose(out2.reshape(Ci, B, seq_t), (1, 0, 2))
    return forward


# ------------------------- parameter init ---------------------------------
def init_params(key, num_layers, c_in, c_out, k):
    ks = jax.random.split(key, 8)
    s = 0.1
    cw = s * jax.random.normal(ks[0], (num_layers, k, c_out, c_in), jnp.float32)
    cb = s * jax.random.normal(ks[1], (num_layers, c_out, 1), jnp.float32)
    gw = s * jax.random.normal(ks[2], (num_layers, k, c_out, c_in), jnp.float32)
    gb = s * jax.random.normal(ks[3], (num_layers, c_out, 1), jnp.float32)
    rw = s * jax.random.normal(ks[4], (num_layers, c_in, c_out), jnp.float32)
    rb = s * jax.random.normal(ks[5], (num_layers, c_in, 1), jnp.float32)
    sw = s * jax.random.normal(ks[6], (num_layers, c_in, c_out), jnp.float32)
    sb = s * jax.random.normal(ks[7], (num_layers, c_in, 1), jnp.float32)
    return cw, cb, gw, gb, rw, rb, sw, sb


# --------------------- pure-JAX reference (for check) ---------------------
def reference(x, pool_mat, params):
    cw, cb, gw, gb, rw, rb, sw, sb = params
    num_layers, K = cw.shape[0], cw.shape[1]
    hp = jax.lax.Precision.HIGHEST
    h = jnp.einsum('bcl,lt->bct', x, pool_mat, precision=hp)
    skip_sum = jnp.zeros_like(h)
    dn = ('NCH', 'OIH', 'NCH')
    for layer in range(num_layers):
        d = 2 ** layer
        pad = (K - 1) * d
        w_c = jnp.transpose(cw[layer], (1, 2, 0))   # (C_out, C_in, K)
        w_g = jnp.transpose(gw[layer], (1, 2, 0))
        conv_c = jax.lax.conv_general_dilated(
            h, w_c, (1,), [(pad, 0)], rhs_dilation=(d,), dimension_numbers=dn,
            precision=hp) + cb[layer][None, :, :]
        conv_g = jax.lax.conv_general_dilated(
            h, w_g, (1,), [(pad, 0)], rhs_dilation=(d,), dimension_numbers=dn,
            precision=hp) + gb[layer][None, :, :]
        gated = jnp.tanh(conv_c) * jax.nn.sigmoid(conv_g)
        residual = jnp.einsum('io,bot->bit', rw[layer], gated,
                              precision=hp) + rb[layer][None]
        skip = jnp.einsum('io,bot->bit', sw[layer], gated,
                          precision=hp) + sb[layer][None]
        h = h + residual
        skip_sum = skip_sum + skip
    return skip_sum


# ------------------------------- main --------------------------------------
if __name__ == "__main__":
    cfg = CONFIG
    key = jax.random.PRNGKey(0)
    kx, kp = jax.random.split(key)

    T = cfg['tgt_token_rate'] * cfg['seq_len']            # pooled length = 16
    LANES = max(128, -(-(BATCH * T) // 128) * 128)        # lane-padded time

    x = jax.random.normal(kx, (BATCH, cfg['in_channels'], IN_LEN), jnp.float32)
    pool_mat = make_adaptive_pool_matrix(IN_LEN, T)
    params = init_params(kp, cfg['num_layers'], cfg['in_channels'],
                         cfg['out_channels'], cfg['kernel_size'])

    # Constants and the forward fn are built ONCE (hoisted off the call path).
    const_slab = build_const_slab(pool_mat, params, BATCH, LANES)
    forward = make_wavenet_forward(cfg['num_layers'], cfg['kernel_size'],
                                   cfg['out_channels'], T, LANES)

    out = jax.block_until_ready(forward(x, const_slab))

    ref = reference(x, jnp.asarray(pool_mat), params)
    # tolerance accounts for MXU f32 pass differences between the fused
    # in-kernel matmuls and the XLA reference ops
    np.testing.assert_allclose(np.asarray(out), np.asarray(ref),
                               rtol=2e-3, atol=2e-3)
    print("KERNEL_OK")
</pallas_src>

<mosaic_0001>
module attributes {stable_mosaic.version = 11 : i64} {
  func.func @wavenet_kernel(%arg0: memref<8x80xf32, #tpu.memory_space<vmem>>, %arg1: memref<176x128xf32, #tpu.memory_space<vmem>>, %arg2: memref<8x128xf32, #tpu.memory_space<vmem>>) attributes {dimension_semantics = [], scalar_prefetch = 0 : i64, scratch_operands = 0 : i64, tpu.core_type = #tpu.core_type<tc>} {
    %c0 = arith.constant 0 : index
    %c0_0 = arith.constant 0 : index
    %0 = vector.load %arg0[%c0, %c0_0] : memref<8x80xf32, #tpu.memory_space<vmem>>, vector<8x80xf32>
    %c0_1 = arith.constant 0 : index
    %c0_2 = arith.constant 0 : index
    %1 = vector.load %arg1[%c0_1, %c0_2] : memref<176x128xf32, #tpu.memory_space<vmem>>, vector<80x128xf32>
    %cst = arith.constant dense<0.000000e+00> : vector<8x128xf32>
    %2 = tpu.matmul %0, %1, %cst {dimension_numbers = #tpu.dot_dimension_numbers<[1], [0], [0], [1], [0, 0, 1, 1], [], []>} : vector<8x80xf32>, vector<80x128xf32>, vector<8x128xf32> -> vector<8x128xf32>
    %3 = tpu.iota {dimensions = array<i32: 1>} : vector<8x128xi32>
    %c16_i32 = arith.constant 16 : i32
    %c0_i32 = arith.constant 0 : i32
    %4 = arith.cmpi eq, %c16_i32, %c0_i32 : i32
    %c1_i32 = arith.constant 1 : i32
    %5 = arith.select %4, %c1_i32, %c16_i32 : i32
    %6 = vector.broadcast %5 : i32 to vector<8x128xi32>
    %7 = arith.remsi %3, %6 : vector<8x128xi32>
    %c0_i32_3 = arith.constant 0 : i32
    %8 = vector.broadcast %c0_i32_3 : i32 to vector<8x128xi32>
    %9 = arith.cmpi ne, %7, %8 : vector<8x128xi32>
    %c0_i32_4 = arith.constant 0 : i32
    %10 = vector.broadcast %c0_i32_4 : i32 to vector<8x128xi32>
    %11 = arith.cmpi slt, %7, %10 : vector<8x128xi32>
    %c0_i32_5 = arith.constant 0 : i32
    %12 = arith.cmpi slt, %5, %c0_i32_5 : i32
    %13 = vector.broadcast %12 : i1 to vector<8x128xi1>
    %14 = vector.broadcast %13 : vector<8x128xi1> to vector<8x128xi1>
    %15 = arith.xori %11, %14 : vector<8x128xi1>
    %16 = arith.andi %15, %9 : vector<8x128xi1>
    %17 = vector.broadcast %5 : i32 to vector<8x128xi32>
    %18 = arith.addi %7, %17 : vector<8x128xi32>
    %19 = arith.select %16, %18, %7 : vector<8x128xi1>, vector<8x128xi32>
    %cst_6 = arith.constant 1.000000e+00 : f32
    %20 = vector.broadcast %cst_6 : f32 to vector<8x128xf32>
    %cst_7 = arith.constant 1.000000e+00 : f32
    %21 = vector.broadcast %cst_7 : f32 to vector<8x128xf32>
    %cst_8 = arith.constant 0.000000e+00 : f32
    %22 = vector.broadcast %cst_8 : f32 to vector<8x128xf32>
    %c2_i32 = arith.constant 2 : i32
    %23 = tpu.dynamic_rotate %2 by %c2_i32 dim 1 : vector<8x128xf32>, i32 -> vector<8x128xf32>
    %c2_i32_9 = arith.constant 2 : i32
    %24 = vector.broadcast %c2_i32_9 : i32 to vector<8x128xi32>
    %25 = arith.cmpi slt, %19, %24 : vector<8x128xi32>
    %cst_10 = arith.constant 0.000000e+00 : f32
    %26 = vector.broadcast %cst_10 : f32 to vector<8x128xf32>
    %27 = arith.select %25, %26, %23 : vector<8x128xi1>, vector<8x128xf32>
    %c1_i32_11 = arith.constant 1 : i32
    %28 = tpu.dynamic_rotate %2 by %c1_i32_11 dim 1 : vector<8x128xf32>, i32 -> vector<8x128xf32>
    %c1_i32_12 = arith.constant 1 : i32
    %29 = vector.broadcast %c1_i32_12 : i32 to vector<8x128xi32>
    %30 = arith.cmpi slt, %19, %29 : vector<8x128xi32>
    %cst_13 = arith.constant 0.000000e+00 : f32
    %31 = vector.broadcast %cst_13 : f32 to vector<8x128xf32>
    %32 = arith.select %30, %31, %28 : vector<8x128xi1>, vector<8x128xf32>
    %33 = tpu.concatenate %27, %32, %2, %20 in 0 : vector<8x128xf32>, vector<8x128xf32>, vector<8x128xf32>, vector<8x128xf32> -> vector<32x128xf32>
    %c80 = arith.constant 80 : index
    %c0_14 = arith.constant 0 : index
    %34 = vector.load %arg1[%c80, %c0_14] : memref<176x128xf32, #tpu.memory_space<vmem>>, vector<16x32xf32>
    %cst_15 = arith.constant dense<0.000000e+00> : vector<16x128xf32>
    %35 = tpu.matmul %34, %33, %cst_15 {dimension_numbers = #tpu.dot_dimension_numbers<[1], [0], [0], [1], [0, 0, 1, 1], [], []>} : vector<16x32xf32>, vector<32x128xf32>, vector<16x128xf32> -> vector<16x128xf32>
    %36 = vector.extract_strided_slice %35 {offsets = [0, 0], sizes = [8, 128], strides = [1, 1]} : vector<16x128xf32> to vector<8x128xf32>
    %37 = math.tanh %36 : vector<8x128xf32>
    %38 = vector.extract_strided_slice %35 {offsets = [8, 0], sizes = [8, 128], strides = [1, 1]} : vector<16x128xf32> to vector<8x128xf32>
    %39 = arith.negf %38 : vector<8x128xf32>
    %40 = math.exp %39 : vector<8x128xf32>
    %cst_16 = arith.constant 1.000000e+00 : f32
    %41 = vector.broadcast %cst_16 : f32 to vector<8x128xf32>
    %42 = arith.addf %41, %40 : vector<8x128xf32>
    %43 = arith.divf %41, %42 : vector<8x128xf32>
    %44 = arith.mulf %37, %43 : vector<8x128xf32>
    %45 = tpu.concatenate %44, %21 in 0 : vector<8x128xf32>, vector<8x128xf32> -> vector<16x128xf32>
    %c128 = arith.constant 128 : index
    %c0_17 = arith.constant 0 : index
    %46 = vector.load %arg1[%c128, %c0_17] : memref<176x128xf32, #tpu.memory_space<vmem>>, vector<16x16xf32>
    %cst_18 = arith.constant dense<0.000000e+00> : vector<16x128xf32>
    %47 = tpu.matmul %46, %45, %cst_18 {dimension_numbers = #tpu.dot_dimension_numbers<[1], [0], [0], [1], [0, 0, 1, 1], [], []>} : vector<16x16xf32>, vector<16x128xf32>, vector<16x128xf32> -> vector<16x128xf32>
    %48 = vector.extract_strided_slice %47 {offsets = [0, 0], sizes = [8, 128], strides = [1, 1]} : vector<16x128xf32> to vector<8x128xf32>
    %49 = arith.addf %2, %48 : vector<8x128xf32>
    %50 = vector.extract_strided_slice %47 {offsets = [8, 0], sizes = [8, 128], strides = [1, 1]} : vector<16x128xf32> to vector<8x128xf32>
    %51 = arith.addf %22, %50 : vector<8x128xf32>
    %c4_i32 = arith.constant 4 : i32
    %52 = tpu.dynamic_rotate %49 by %c4_i32 dim 1 : vector<8x128xf32>, i32 -> vector<8x128xf32>
    %c4_i32_19 = arith.constant 4 : i32
    %53 = vector.broadcast %c4_i32_19 : i32 to vector<8x128xi32>
    %54 = arith.cmpi slt, %19, %53 : vector<8x128xi32>
    %cst_20 = arith.constant 0.000000e+00 : f32
    %55 = vector.broadcast %cst_20 : f32 to vector<8x128xf32>
    %56 = arith.select %54, %55, %52 : vector<8x128xi1>, vector<8x128xf32>
    %c2_i32_21 = arith.constant 2 : i32
    %57 = tpu.dynamic_rotate %49 by %c2_i32_21 dim 1 : vector<8x128xf32>, i32 -> vector<8x128xf32>
    %c2_i32_22 = arith.constant 2 : i32
    %58 = vector.broadcast %c2_i32_22 : i32 to vector<8x128xi32>
    %59 = arith.cmpi slt, %19, %58 : vector<8x128xi32>
    %cst_23 = arith.constant 0.000000e+00 : f32
    %60 = vector.broadcast %cst_23 : f32 to vector<8x128xf32>
    %61 = arith.select %59, %60, %57 : vector<8x128xi1>, vector<8x128xf32>
    %62 = tpu.concatenate %56, %61, %49, %20 in 0 : vector<8x128xf32>, vector<8x128xf32>, vector<8x128xf32>, vector<8x128xf32> -> vector<32x128xf32>
    %c96 = arith.constant 96 : index
    %c0_24 = arith.constant 0 : index
    %63 = vector.load %arg1[%c96, %c0_24] : memref<176x128xf32, #tpu.memory_space<vmem>>, vector<16x32xf32>
    %cst_25 = arith.constant dense<0.000000e+00> : vector<16x128xf32>
    %64 = tpu.matmul %63, %62, %cst_25 {dimension_numbers = #tpu.dot_dimension_numbers<[1], [0], [0], [1], [0, 0, 1, 1], [], []>} : vector<16x32xf32>, vector<32x128xf32>, vector<16x128xf32> -> vector<16x128xf32>
    %65 = vector.extract_strided_slice %64 {offsets = [0, 0], sizes = [8, 128], strides = [1, 1]} : vector<16x128xf32> to vector<8x128xf32>
    %66 = math.tanh %65 : vector<8x128xf32>
    %67 = vector.extract_strided_slice %64 {offsets = [8, 0], sizes = [8, 128], strides = [1, 1]} : vector<16x128xf32> to vector<8x128xf32>
    %68 = arith.negf %67 : vector<8x128xf32>
    %69 = math.exp %68 : vector<8x128xf32>
    %cst_26 = arith.constant 1.000000e+00 : f32
    %70 = vector.broadcast %cst_26 : f32 to vector<8x128xf32>
    %71 = arith.addf %70, %69 : vector<8x128xf32>
    %72 = arith.divf %70, %71 : vector<8x128xf32>
    %73 = arith.mulf %66, %72 : vector<8x128xf32>
    %74 = tpu.concatenate %73, %21 in 0 : vector<8x128xf32>, vector<8x128xf32> -> vector<16x128xf32>
    %c144 = arith.constant 144 : index
    %c0_27 = arith.constant 0 : index
    %75 = vector.load %arg1[%c144, %c0_27] : memref<176x128xf32, #tpu.memory_space<vmem>>, vector<16x16xf32>
    %cst_28 = arith.constant dense<0.000000e+00> : vector<16x128xf32>
    %76 = tpu.matmul %75, %74, %cst_28 {dimension_numbers = #tpu.dot_dimension_numbers<[1], [0], [0], [1], [0, 0, 1, 1], [], []>} : vector<16x16xf32>, vector<16x128xf32>, vector<16x128xf32> -> vector<16x128xf32>
    %77 = vector.extract_strided_slice %76 {offsets = [0, 0], sizes = [8, 128], strides = [1, 1]} : vector<16x128xf32> to vector<8x128xf32>
    %78 = arith.addf %49, %77 : vector<8x128xf32>
    %79 = vector.extract_strided_slice %76 {offsets = [8, 0], sizes = [8, 128], strides = [1, 1]} : vector<16x128xf32> to vector<8x128xf32>
    %80 = arith.addf %51, %79 : vector<8x128xf32>
    %c8_i32 = arith.constant 8 : i32
    %81 = tpu.dynamic_rotate %78 by %c8_i32 dim 1 : vector<8x128xf32>, i32 -> vector<8x128xf32>
    %c8_i32_29 = arith.constant 8 : i32
    %82 = vector.broadcast %c8_i32_29 : i32 to vector<8x128xi32>
    %83 = arith.cmpi slt, %19, %82 : vector<8x128xi32>
    %cst_30 = arith.constant 0.000000e+00 : f32
    %84 = vector.broadcast %cst_30 : f32 to vector<8x128xf32>
    %85 = arith.select %83, %84, %81 : vector<8x128xi1>, vector<8x128xf32>
    %c4_i32_31 = arith.constant 4 : i32
    %86 = tpu.dynamic_rotate %78 by %c4_i32_31 dim 1 : vector<8x128xf32>, i32 -> vector<8x128xf32>
    %c4_i32_32 = arith.constant 4 : i32
    %87 = vector.broadcast %c4_i32_32 : i32 to vector<8x128xi32>
    %88 = arith.cmpi slt, %19, %87 : vector<8x128xi32>
    %cst_33 = arith.constant 0.000000e+00 : f32
    %89 = vector.broadcast %cst_33 : f32 to vector<8x128xf32>
    %90 = arith.select %88, %89, %86 : vector<8x128xi1>, vector<8x128xf32>
    %91 = tpu.concatenate %85, %90, %78, %20 in 0 : vector<8x128xf32>, vector<8x128xf32>, vector<8x128xf32>, vector<8x128xf32> -> vector<32x128xf32>
    %c112 = arith.constant 112 : index
    %c0_34 = arith.constant 0 : index
    %92 = vector.load %arg1[%c112, %c0_34] : memref<176x128xf32, #tpu.memory_space<vmem>>, vector<16x32xf32>
    %cst_35 = arith.constant dense<0.000000e+00> : vector<16x128xf32>
    %93 = tpu.matmul %92, %91, %cst_35 {dimension_numbers = #tpu.dot_dimension_numbers<[1], [0], [0], [1], [0, 0, 1, 1], [], []>} : vector<16x32xf32>, vector<32x128xf32>, vector<16x128xf32> -> vector<16x128xf32>
    %94 = vector.extract_strided_slice %93 {offsets = [0, 0], sizes = [8, 128], strides = [1, 1]} : vector<16x128xf32> to vector<8x128xf32>
    %95 = math.tanh %94 : vector<8x128xf32>
    %96 = vector.extract_strided_slice %93 {offsets = [8, 0], sizes = [8, 128], strides = [1, 1]} : vector<16x128xf32> to vector<8x128xf32>
    %97 = arith.negf %96 : vector<8x128xf32>
    %98 = math.exp %97 : vector<8x128xf32>
    %cst_36 = arith.constant 1.000000e+00 : f32
    %99 = vector.broadcast %cst_36 : f32 to vector<8x128xf32>
    %100 = arith.addf %99, %98 : vector<8x128xf32>
    %101 = arith.divf %99, %100 : vector<8x128xf32>
    %102 = arith.mulf %95, %101 : vector<8x128xf32>
    %103 = tpu.concatenate %102, %21 in 0 : vector<8x128xf32>, vector<8x128xf32> -> vector<16x128xf32>
    %c160 = arith.constant 160 : index
    %c0_37 = arith.constant 0 : index
    %104 = vector.load %arg1[%c160, %c0_37] : memref<176x128xf32, #tpu.memory_space<vmem>>, vector<16x16xf32>
    %cst_38 = arith.constant dense<0.000000e+00> : vector<16x128xf32>
    %105 = tpu.matmul %104, %103, %cst_38 {dimension_numbers = #tpu.dot_dimension_numbers<[1], [0], [0], [1], [0, 0, 1, 1], [], []>} : vector<16x16xf32>, vector<16x128xf32>, vector<16x128xf32> -> vector<16x128xf32>
    %106 = vector.extract_strided_slice %105 {offsets = [8, 0], sizes = [8, 128], strides = [1, 1]} : vector<16x128xf32> to vector<8x128xf32>
    %107 = arith.addf %80, %106 : vector<8x128xf32>
    %c0_39 = arith.constant 0 : index
    %c0_40 = arith.constant 0 : index
    %108 = vector.load %arg2[%c0_39, %c0_40] : memref<8x128xf32, #tpu.memory_space<vmem>>, vector<8x128xf32>
    tpu.vector_store %arg2[%c0_39, %c0_40], %107 {strides = array<i32>} : memref<8x128xf32, #tpu.memory_space<vmem>>, vector<8x128xf32>,
    return
  }
}

</mosaic_0001>

<llo_original>
// kernel: forward.1
$region0: #{forward.1}
  #allocation0 [shape = 'u32[]', space=smem, size = 0x4, offset = 0x4, fixed_abs, tag = 'smem constant byte address 0x4 - core index']
  #allocation1 [shape = 'u32[144,128]{1,0:T(1,128)}', space=vmem, size = 0x12000, scoped, tag = 'internal scratch']
  %s0 = inlined_call_operand.vmem [shape: f32[8,80], index: 0, kind: input, shape index: {}]
  %s1 = inlined_call_operand.hbm [shape: f32[176,128], index: 1, kind: input, shape index: {}]
  %s2 = inlined_call_operand.vmem [shape: f32[8,128], index: 2, kind: output, shape index: {}]
  %s3 = sld [smem:[#allocation0]]
  $region22: #{forward.1} parent=0
    _
  %s5 = ssub.s32 1, %s3
  %s6 = scalar_select 0, %s5, %s3
  $region1: #{forward.1} parent=0
    #allocation2 [shape = 'u8[90112]{0}', space=vmem, size = 0x16000, scoped, tag = 'input window, operand 1, single buffered']
    #allocation3 [shape = 's32[1]{0}', space=sflag, size = 0x4, scoped, tag = 'scoped memory for forward.1']
    %7 = vsyncpa [#allocation3], 0
    // Predicated region
    $region2: #{forward.1} parent=1 // pred_check
      _
    $region3: #{forward.1} parent=1 // pred_check_branch
      %9 = sbr.rel (0) target = $region5
    $region4: #{forward.1} parent=1 // pred_region
      _
    $region5: #{forward.1} parent=1 // pred_fallthru
      _
    // Predicated region
    $region6: #{forward.1} parent=1 // pred_check
      _
    $region7: #{forward.1} parent=1 // pred_check_branch
      %11 = sbr.rel (0) target = $region9
    $region8: #{forward.1} parent=1 // pred_region
      %s13 = ssub.s32 2816, 2816
      %14 = vsyncadd [#allocation3], %s13
      %s15 = sshll.u32 [#allocation2], 4
      %s16 = int_to_ptr.vmem [resolvable:$true] %s15
      %21 = dma.hbm_to_vmem [thread:$0]  %s1, 2816, %s16, [#allocation3], 128, 128, 8
    $region9: #{forward.1} parent=1 // pred_fallthru
      _
    // Predicated region
    $region10: #{forward.1} parent=1 // pred_check
      _
    $region11: #{forward.1} parent=1 // pred_check_branch
      %23 = sbr.rel (0) target = $region13
    $region12: #{forward.1} parent=1 // pred_region
      %24 = dma.done [#allocation3], 2816
    $region13: #{forward.1} parent=1 // pred_fallthru
      _
    %v25 = vld [vmem:[%s0] sm:$0xff]
    %v26 = vld [vmem:[#allocation2] sm:$0xff]
    %v27 = vld [vmem:[#allocation2 + $0x8] sm:$0xff]
    %v28 = vld [vmem:[#allocation2 + $0x10] sm:$0xff]
    %v29 = vld [vmem:[#allocation2 + $0x18] sm:$0xff]
    %v30 = vld [vmem:[#allocation2 + $0x20] sm:$0xff]
    %v31 = vld [vmem:[#allocation2 + $0x28] sm:$0xff]
    %v32 = vld [vmem:[#allocation2 + $0x30] sm:$0xff]
    %v33 = vld [vmem:[#allocation2 + $0x38] sm:$0xff]
    %v34 = vld [vmem:[#allocation2 + $0x40] sm:$0xff]
    %v35 = vld [vmem:[#allocation2 + $0x48] sm:$0xff]
    %vm36 = vcmask 654336
    %v38 = vsel %vm36, %v25, 0
    %40 = vmatprep.subr.mxu0 0.0
    %41 = vmatpush1.msra.mxu0 %v26
    %42 = vmatprep.subr.mxu0 0.0
    %43 = vmatpush1.msra.mxu0 %v27
    %44 = vmatprep.subr.mxu0 0.0
    %45 = vmatpush1.msra.mxu0 %v28
    %46 = vmatprep.subr.mxu0 0.0
    %47 = vmatpush1.msra.mxu0 %v29
    %48 = vmatprep.subr.mxu0 0.0
    %49 = vmatpush1.msra.mxu0 %v30
    %50 = vmatprep.subr.mxu0 0.0
    %51 = vmatpush1.msra.mxu0 %v31
    %52 = vmatprep.subr.mxu0 0.0
    %53 = vmatpush1.msra.mxu0 %v32
    %54 = vmatprep.subr.mxu0 0.0
    %55 = vmatpush1.msra.mxu0 %v33
    %56 = vmatprep.subr.mxu0 0.0
    %57 = vmatpush1.msra.mxu0 %v34
    %58 = vmatprep.subr.mxu0 0.0
    %59 = vmatpush1.msra.mxu0 %v35
    %60 = vmatprep.subr.mxu0 0.0
    %61 = vmatpush1.msra.mxu0 0.0
    %62 = vmatprep.subr.mxu0 0.0
    %63 = vmatpush1.msra.mxu0 0.0
    %64 = vmatprep.subr.mxu0 0.0
    %65 = vmatpush1.msra.mxu0 0.0
    %66 = vmatprep.subr.mxu0 0.0
    %67 = vmatpush1.msra.mxu0 0.0
    %68 = vmatprep.subr.mxu0 0.0
    %69 = vmatpush1.msra.mxu0 0.0
    %70 = vmatprep.subr.mxu0 0.0
    %71 = vmatpush1.msra.mxu0 0.0
    %72 = vmatprep.subr.mxu0 0.0
    %73 = vmatpush1.msra.mxu0 0.0
    %74 = vmatprep.subr.mxu0 0.0
    %75 = vmatpush1.msra.mxu0 0.0
    %76 = vmatprep.subr.mxu0 0.0
    %77 = vmatpush1.msra.mxu0 0.0
    %78 = vmatprep.subr.mxu0 0.0
    %79 = vmatpush1.msra.mxu0 0.0
    %80 = vmatprep.subr.mxu0 0.0
    %81 = vmatpush1.msra.mxu0 0.0
    %82 = vmatprep.subr.mxu0 0.0
    %83 = vmatpush1.msra.mxu0 0.0
    %84 = vmatprep.subr.mxu0 0.0
    %85 = vmatpush1.msra.mxu0 0.0
    %86 = vmatprep.subr.mxu0 0.0
    %87 = vmatpush1.msra.mxu0 0.0
    %88 = vmatprep.subr.mxu0 0.0
    %89 = vmatpush1.msra.mxu0 0.0
    %90 = vmatprep.subr.mxu0 0.0
    %91 = vmatpush1.msra.mxu0 0.0
    %92 = vmatprep.subr.mxu0 0.0
    %93 = vmatpush1.msra.mxu0 0.0
    %94 = vmatprep.subr.mxu0 0.0
    %95 = vmatpush1.msra.mxu0 0.0
    %96 = vmatprep.subr.mxu0 0.0
    %97 = vmatpush1.msra.mxu0 0.0
    %98 = vmatprep.subr.mxu0 0.0
    %99 = vmatpush1.msra.mxu0 0.0
    %100 = vmatprep.subr.mxu0 0.0
    %101 = vmatpush1.msra.mxu0 0.0
    %102 = vmatprep.subr.mxu0 0.0
    %103 = vmatpush1.msra.mxu0 0.0
    %104 = vmatprep.mubr.f32.mxu0 0.0
    %105 = vmatmul.mubr.f32.gmra.mrb[0].mxu0 %v38
    %v106 = vpop.f32.mrb[0].mxu0
    %v107 = vadd.f32 0.0, %v106
    %v108 = vpop.f32.mrb[0].mxu0
    %109 = vdwg.mxu0
    %v110 = vlaneseq
    %v111 = vand.u32 %v110, 127
    %vm112 = vcmp.lt.s32.totalorder %v111, 0
    %v113 = vsub.s32 0, %v111
    %v114 = vsel %vm112, %v113, %v111
    %v115 = vshrl.u32 %v114, 4
    %v116 = vand.u32 %v114, 15
    %v117 = vsub.s32 0, %v116
    %v118 = vsel %vm112, %v117, %v116
    %vm119 = vcmp.ne.s32.totalorder %v118, 0
    %vm120 = vcmp.lt.s32.totalorder %v118, 0
    %vm121 = vmand %vm120, %vm119
    %v122 = vadd.s32 %v118, 16
    %v123 = vsel %vm121, %v122, %v118
    %124 = vrot.lane.b32.xlu0 %v107, 2
    %v125 = vpop.permute.xlu0 %124
    %vm126 = vcmp.lt.s32.totalorder %v123, 2
    %v127 = vsel %vm126, 0.0, %v125
    %128 = vrot.lane.b32.xlu0 %v107, 1
    %v129 = vpop.permute.xlu0 %128
    %vm130 = vcmp.lt.s32.totalorder %v123, 1
    %v131 = vsel %vm130, 0.0, %v129
    %v132 = vld [vmem:[#allocation2 + $0x50] sm:$0xff]
    %v133 = vld [vmem:[#allocation2 + $0x58] sm:$0xff]
    %vm134 = vcmask 261120
    %v136 = vsel %vm134, %v132, 0
    %v139 = vsel %vm134, %v133, 0
    %141 = vmatprep.subr.mxu0 0.0
    %142 = vmatpush1.msra.mxu0 %v127
    %143 = vmatprep.subr.mxu0 0.0
    %144 = vmatpush1.msra.mxu0 %v131
    %145 = vmatprep.subr.mxu0 0.0
    %146 = vmatpush1.msra.mxu0 %v107
    %147 = vmatprep.subr.mxu0 0.0
    %148 = vmatpush1.msra.mxu0 1.0
    %149 = vmatprep.subr.mxu0 0.0
    %150 = vmatpush1.msra.mxu0 0.0
    %151 = vmatprep.subr.mxu0 0.0
    %152 = vmatpush1.msra.mxu0 0.0
    %153 = vmatprep.subr.mxu0 0.0
    %154 = vmatpush1.msra.mxu0 0.0
    %155 = vmatprep.subr.mxu0 0.0
    %156 = vmatpush1.msra.mxu0 0.0
    %157 = vmatprep.subr.mxu0 0.0
    %158 = vmatpush1.msra.mxu0 0.0
    %159 = vmatprep.subr.mxu0 0.0
    %160 = vmatpush1.msra.mxu0 0.0
    %161 = vmatprep.subr.mxu0 0.0
    %162 = vmatpush1.msra.mxu0 0.0
    %163 = vmatprep.subr.mxu0 0.0
    %164 = vmatpush1.msra.mxu0 0.0
    %165 = vmatprep.subr.mxu0 0.0
    %166 = vmatpush1.msra.mxu0 0.0
    %167 = vmatprep.subr.mxu0 0.0
    %168 = vmatpush1.msra.mxu0 0.0
    %169 = vmatprep.subr.mxu0 0.0
    %170 = vmatpush1.msra.mxu0 0.0
    %171 = vmatprep.subr.mxu0 0.0
    %172 = vmatpush1.msra.mxu0 0.0
    %173 = vmatprep.subr.mxu0 0.0
    %174 = vmatpush1.msra.mxu0 0.0
    %175 = vmatprep.subr.mxu0 0.0
    %176 = vmatpush1.msra.mxu0 0.0
    %177 = vmatprep.subr.mxu0 0.0
    %178 = vmatpush1.msra.mxu0 0.0
    %179 = vmatprep.subr.mxu0 0.0
    %180 = vmatpush1.msra.mxu0 0.0
    %181 = vmatprep.subr.mxu0 0.0
    %182 = vmatpush1.msra.mxu0 0.0
    %183 = vmatprep.subr.mxu0 0.0
    %184 = vmatpush1.msra.mxu0 0.0
    %185 = vmatprep.subr.mxu0 0.0
    %186 = vmatpush1.msra.mxu0 0.0
    %187 = vmatprep.subr.mxu0 0.0
    %188 = vmatpush1.msra.mxu0 0.0
    %189 = vmatprep.subr.mxu0 0.0
    %190 = vmatpush1.msra.mxu0 0.0
    %191 = vmatprep.subr.mxu0 0.0
    %192 = vmatpush1.msra.mxu0 0.0
    %193 = vmatprep.subr.mxu0 0.0
    %194 = vmatpush1.msra.mxu0 0.0
    %195 = vmatprep.subr.mxu0 0.0
    %196 = vmatpush1.msra.mxu0 0.0
    %197 = vmatprep.subr.mxu0 0.0
    %198 = vmatpush1.msra.mxu0 0.0
    %199 = vmatprep.subr.mxu0 0.0
    %200 = vmatpush1.msra.mxu0 0.0
    %201 = vmatprep.subr.mxu0 0.0
    %202 = vmatpush1.msra.mxu0 0.0
    %203 = vmatprep.subr.mxu0 0.0
    %204 = vmatpush1.msra.mxu0 0.0
    %205 = vmatprep.mubr.f32.mxu0 0.0
    %206 = vmatmul.mubr.f32.gmra.mrb[0].mxu0 %v136
    %v207 = vpop.f32.mrb[0].mxu0
    %v208 = vadd.f32 0.0, %v207
    %v209 = vpop.f32.mrb[0].mxu0
    %210 = vmatprep.mubr.f32.mxu0 0.0
    %211 = vmatmul.mubr.f32.gmra.mrb[0].mxu0 %v139
    %v212 = vpop.f32.mrb[0].mxu0
    %v213 = vadd.f32 0.0, %v212
    %v214 = vpop.f32.mrb[0].mxu0
    %215 = vdwg.mxu0
    %v216 = vtanh.pop %v208
    %v217 = vxor.u32 %v213, 2147483648
    %v218 = vmul.f32 %v217, 1.442695
    %v219 = vpow.pop %v218
    %v220 = vadd.f32 %v219, 1.0
    %v221 = vrcp.pop %v220
    %v222 = vmul.f32 1.0, %v221
    %v223 = vmul.f32 %v216, %v222
    %v224 = vld [vmem:[#allocation2 + $0x80] sm:$0xff]
    %v225 = vld [vmem:[#allocation2 + $0x88] sm:$0xff]
    %vm226 = vcmask 130048
    %v228 = vsel %vm226, %v224, 0
    %v231 = vsel %vm226, %v225, 0
    %233 = vmatprep.subr.mxu0 0.0
    %234 = vmatpush1.msra.mxu0 %v223
    %235 = vmatprep.subr.mxu0 0.0
    %236 = vmatpush1.msra.mxu0 1.0
    %237 = vmatprep.subr.mxu0 0.0
    %238 = vmatpush1.msra.mxu0 0.0
    %239 = vmatprep.subr.mxu0 0.0
    %240 = vmatpush1.msra.mxu0 0.0
    %241 = vmatprep.subr.mxu0 0.0
    %242 = vmatpush1.msra.mxu0 0.0
    %243 = vmatprep.subr.mxu0 0.0
    %244 = vmatpush1.msra.mxu0 0.0
    %245 = vmatprep.subr.mxu0 0.0
    %246 = vmatpush1.msra.mxu0 0.0
    %247 = vmatprep.subr.mxu0 0.0
    %248 = vmatpush1.msra.mxu0 0.0
    %249 = vmatprep.subr.mxu0 0.0
    %250 = vmatpush1.msra.mxu0 0.0
    %251 = vmatprep.subr.mxu0 0.0
    %252 = vmatpush1.msra.mxu0 0.0
    %253 = vmatprep.subr.mxu0 0.0
    %254 = vmatpush1.msra.mxu0 0.0
    %255 = vmatprep.subr.mxu0 0.0
    %256 = vmatpush1.msra.mxu0 0.0
    %257 = vmatprep.subr.mxu0 0.0
    %258 = vmatpush1.msra.mxu0 0.0
    %259 = vmatprep.subr.mxu0 0.0
    %260 = vmatpush1.msra.mxu0 0.0
    %261 = vmatprep.subr.mxu0 0.0
    %262 = vmatpush1.msra.mxu0 0.0
    %263 = vmatprep.subr.mxu0 0.0
    %264 = vmatpush1.msra.mxu0 0.0
    %265 = vmatprep.subr.mxu0 0.0
    %266 = vmatpush1.msra.mxu0 0.0
    %267 = vmatprep.subr.mxu0 0.0
    %268 = vmatpush1.msra.mxu0 0.0
    %269 = vmatprep.subr.mxu0 0.0
    %270 = vmatpush1.msra.mxu0 0.0
    %271 = vmatprep.subr.mxu0 0.0
    %272 = vmatpush1.msra.mxu0 0.0
    %273 = vmatprep.subr.mxu0 0.0
    %274 = vmatpush1.msra.mxu0 0.0
    %275 = vmatprep.subr.mxu0 0.0
    %276 = vmatpush1.msra.mxu0 0.0
    %277 = vmatprep.subr.mxu0 0.0
    %278 = vmatpush1.msra.mxu0 0.0
    %279 = vmatprep.subr.mxu0 0.0
    %280 = vmatpush1.msra.mxu0 0.0
    %281 = vmatprep.subr.mxu0 0.0
    %282 = vmatpush1.msra.mxu0 0.0
    %283 = vmatprep.subr.mxu0 0.0
    %284 = vmatpush1.msra.mxu0 0.0
    %285 = vmatprep.subr.mxu0 0.0
    %286 = vmatpush1.msra.mxu0 0.0
    %287 = vmatprep.subr.mxu0 0.0
    %288 = vmatpush1.msra.mxu0 0.0
    %289 = vmatprep.subr.mxu0 0.0
    %290 = vmatpush1.msra.mxu0 0.0
    %291 = vmatprep.subr.mxu0 0.0
    %292 = vmatpush1.msra.mxu0 0.0
    %293 = vmatprep.subr.mxu0 0.0
    %294 = vmatpush1.msra.mxu0 0.0
    %295 = vmatprep.subr.mxu0 0.0
    %296 = vmatpush1.msra.mxu0 0.0
    %297 = vmatprep.mubr.f32.mxu0 0.0
    %298 = vmatmul.mubr.f32.gmra.mrb[0].mxu0 %v228
    %v299 = vpop.f32.mrb[0].mxu0
    %v300 = vadd.f32 0.0, %v299
    %v301 = vpop.f32.mrb[0].mxu0
    %302 = vmatprep.mubr.f32.mxu0 0.0
    %303 = vmatmul.mubr.f32.gmra.mrb[0].mxu0 %v231
    %v304 = vpop.f32.mrb[0].mxu0
    %v305 = vadd.f32 0.0, %v304
    %v306 = vpop.f32.mrb[0].mxu0
    %307 = vdwg.mxu0
    %v308 = vadd.f32 %v107, %v300
    %v309 = vadd.f32 %v305, 0.0
    %310 = vrot.lane.b32.xlu0 %v308, 4
    %v311 = vpop.permute.xlu0 %310
    %vm312 = vcmp.lt.s32.totalorder %v123, 4
    %v313 = vsel %vm312, 0.0, %v311
    %314 = vrot.lane.b32.xlu0 %v308, 2
    %v315 = vpop.permute.xlu0 %314
    %v316 = vsel %vm126, 0.0, %v315
    %v317 = vld [vmem:[#allocation2 + $0x60] sm:$0xff]
    %v318 = vld [vmem:[#allocation2 + $0x68] sm:$0xff]
    %v320 = vsel %vm134, %v317, 0
    %v323 = vsel %vm134, %v318, 0
    %325 = vmatprep.subr.mxu0 0.0
    %326 = vmatpush1.msra.mxu0 %v313
    %327 = vmatprep.subr.mxu0 0.0
    %328 = vmatpush1.msra.mxu0 %v316
    %329 = vmatprep.subr.mxu0 0.0
    %330 = vmatpush1.msra.mxu0 %v308
    %331 = vmatprep.subr.mxu0 0.0
    %332 = vmatpush1.msra.mxu0 1.0
    %333 = vmatprep.subr.mxu0 0.0
    %334 = vmatpush1.msra.mxu0 0.0
    %335 = vmatprep.subr.mxu0 0.0
    %336 = vmatpush1.msra.mxu0 0.0
    %337 = vmatprep.subr.mxu0 0.0
    %338 = vmatpush1.msra.mxu0 0.0
    %339 = vmatprep.subr.mxu0 0.0
    %340 = vmatpush1.msra.mxu0 0.0
    %341 = vmatprep.subr.mxu0 0.0
    %342 = vmatpush1.msra.mxu0 0.0
    %343 = vmatprep.subr.mxu0 0.0
    %344 = vmatpush1.msra.mxu0 0.0
    %345 = vmatprep.subr.mxu0 0.0
    %346 = vmatpush1.msra.mxu0 0.0
    %347 = vmatprep.subr.mxu0 0.0
    %348 = vmatpush1.msra.mxu0 0.0
    %349 = vmatprep.subr.mxu0 0.0
    %350 = vmatpush1.msra.mxu0 0.0
    %351 = vmatprep.subr.mxu0 0.0
    %352 = vmatpush1.msra.mxu0 0.0
    %353 = vmatprep.subr.mxu0 0.0
    %354 = vmatpush1.msra.mxu0 0.0
    %355 = vmatprep.subr.mxu0 0.0
    %356 = vmatpush1.msra.mxu0 0.0
    %357 = vmatprep.subr.mxu0 0.0
    %358 = vmatpush1.msra.mxu0 0.0
    %359 = vmatprep.subr.mxu0 0.0
    %360 = vmatpush1.msra.mxu0 0.0
    %361 = vmatprep.subr.mxu0 0.0
    %362 = vmatpush1.msra.mxu0 0.0
    %363 = vmatprep.subr.mxu0 0.0
    %364 = vmatpush1.msra.mxu0 0.0
    %365 = vmatprep.subr.mxu0 0.0
    %366 = vmatpush1.msra.mxu0 0.0
    %367 = vmatprep.subr.mxu0 0.0
    %368 = vmatpush1.msra.mxu0 0.0
    %369 = vmatprep.subr.mxu0 0.0
    %370 = vmatpush1.msra.mxu0 0.0
    %371 = vmatprep.subr.mxu0 0.0
    %372 = vmatpush1.msra.mxu0 0.0
    %373 = vmatprep.subr.mxu0 0.0
    %374 = vmatpush1.msra.mxu0 0.0
    %375 = vmatprep.subr.mxu0 0.0
    %376 = vmatpush1.msra.mxu0 0.0
    %377 = vmatprep.subr.mxu0 0.0
    %378 = vmatpush1.msra.mxu0 0.0
    %379 = vmatprep.subr.mxu0 0.0
    %380 = vmatpush1.msra.mxu0 0.0
    %381 = vmatprep.subr.mxu0 0.0
    %382 = vmatpush1.msra.mxu0 0.0
    %383 = vmatprep.subr.mxu0 0.0
    %384 = vmatpush1.msra.mxu0 0.0
    %385 = vmatprep.subr.mxu0 0.0
    %386 = vmatpush1.msra.mxu0 0.0
    %387 = vmatprep.subr.mxu0 0.0
    %388 = vmatpush1.msra.mxu0 0.0
    %389 = vmatprep.mubr.f32.mxu0 0.0
    %390 = vmatmul.mubr.f32.gmra.mrb[0].mxu0 %v320
    %v391 = vpop.f32.mrb[0].mxu0
    %v392 = vadd.f32 0.0, %v391
    %v393 = vpop.f32.mrb[0].mxu0
    %394 = vmatprep.mubr.f32.mxu0 0.0
    %395 = vmatmul.mubr.f32.gmra.mrb[0].mxu0 %v323
    %v396 = vpop.f32.mrb[0].mxu0
    %v397 = vadd.f32 0.0, %v396
    %v398 = vpop.f32.mrb[0].mxu0
    %399 = vdwg.mxu0
    %v400 = vtanh.pop %v392
    %v401 = vxor.u32 %v397, 2147483648
    %v402 = vmul.f32 %v401, 1.442695
    %v403 = vpow.pop %v402
    %v404 = vadd.f32 %v403, 1.0
    %v405 = vrcp.pop %v404
    %v406 = vmul.f32 1.0, %v405
    %v407 = vmul.f32 %v400, %v406
    %v408 = vld [vmem:[#allocation2 + $0x90] sm:$0xff]
    %v409 = vld [vmem:[#allocation2 + $0x98] sm:$0xff]
    %v411 = vsel %vm226, %v408, 0
    %v414 = vsel %vm226, %v409, 0
    %416 = vmatprep.subr.mxu0 0.0
    %417 = vmatpush1.msra.mxu0 %v407
    %418 = vmatprep.subr.mxu0 0.0
    %419 = vmatpush1.msra.mxu0 1.0
    %420 = vmatprep.subr.mxu0 0.0
    %421 = vmatpush1.msra.mxu0 0.0
    %422 = vmatprep.subr.mxu0 0.0
    %423 = vmatpush1.msra.mxu0 0.0
    %424 = vmatprep.subr.mxu0 0.0
    %425 = vmatpush1.msra.mxu0 0.0
    %426 = vmatprep.subr.mxu0 0.0
    %427 = vmatpush1.msra.mxu0 0.0
    %428 = vmatprep.subr.mxu0 0.0
    %429 = vmatpush1.msra.mxu0 0.0
    %430 = vmatprep.subr.mxu0 0.0
    %431 = vmatpush1.msra.mxu0 0.0
    %432 = vmatprep.subr.mxu0 0.0
    %433 = vmatpush1.msra.mxu0 0.0
    %434 = vmatprep.subr.mxu0 0.0
    %435 = vmatpush1.msra.mxu0 0.0
    %436 = vmatprep.subr.mxu0 0.0
    %437 = vmatpush1.msra.mxu0 0.0
    %438 = vmatprep.subr.mxu0 0.0
    %439 = vmatpush1.msra.mxu0 0.0
    %440 = vmatprep.subr.mxu0 0.0
    %441 = vmatpush1.msra.mxu0 0.0
    %442 = vmatprep.subr.mxu0 0.0
    %443 = vmatpush1.msra.mxu0 0.0
    %444 = vmatprep.subr.mxu0 0.0
    %445 = vmatpush1.msra.mxu0 0.0
    %446 = vmatprep.subr.mxu0 0.0
    %447 = vmatpush1.msra.mxu0 0.0
    %448 = vmatprep.subr.mxu0 0.0
    %449 = vmatpush1.msra.mxu0 0.0
    %450 = vmatprep.subr.mxu0 0.0
    %451 = vmatpush1.msra.mxu0 0.0
    %452 = vmatprep.subr.mxu0 0.0
    %453 = vmatpush1.msra.mxu0 0.0
    %454 = vmatprep.subr.mxu0 0.0
    %455 = vmatpush1.msra.mxu0 0.0
    %456 = vmatprep.subr.mxu0 0.0
    %457 = vmatpush1.msra.mxu0 0.0
    %458 = vmatprep.subr.mxu0 0.0
    %459 = vmatpush1.msra.mxu0 0.0
    %460 = vmatprep.subr.mxu0 0.0
    %461 = vmatpush1.msra.mxu0 0.0
    %462 = vmatprep.subr.mxu0 0.0
    %463 = vmatpush1.msra.mxu0 0.0
    %464 = vmatprep.subr.mxu0 0.0
    %465 = vmatpush1.msra.mxu0 0.0
    %466 = vmatprep.subr.mxu0 0.0
    %467 = vmatpush1.msra.mxu0 0.0
    %468 = vmatprep.subr.mxu0 0.0
    %469 = vmatpush1.msra.mxu0 0.0
    %470 = vmatprep.subr.mxu0 0.0
    %471 = vmatpush1.msra.mxu0 0.0
    %472 = vmatprep.subr.mxu0 0.0
    %473 = vmatpush1.msra.mxu0 0.0
    %474 = vmatprep.subr.mxu0 0.0
    %475 = vmatpush1.msra.mxu0 0.0
    %476 = vmatprep.subr.mxu0 0.0
    %477 = vmatpush1.msra.mxu0 0.0
    %478 = vmatprep.subr.mxu0 0.0
    %479 = vmatpush1.msra.mxu0 0.0
    %480 = vmatprep.mubr.f32.mxu0 0.0
    %481 = vmatmul.mubr.f32.gmra.mrb[0].mxu0 %v411
    %v482 = vpop.f32.mrb[0].mxu0
    %v483 = vadd.f32 0.0, %v482
    %v484 = vpop.f32.mrb[0].mxu0
    %485 = vmatprep.mubr.f32.mxu0 0.0
    %486 = vmatmul.mubr.f32.gmra.mrb[0].mxu0 %v414
    %v487 = vpop.f32.mrb[0].mxu0
    %v488 = vadd.f32 0.0, %v487
    %v489 = vpop.f32.mrb[0].mxu0
    %490 = vdwg.mxu0
    %v491 = vadd.f32 %v308, %v483
    %v492 = vadd.f32 %v309, %v488
    %493 = vrot.lane.b32.xlu0 %v491, 8
    %v494 = vpop.permute.xlu0 %493
    %vm495 = vcmp.lt.s32.totalorder %v123, 8
    %v496 = vsel %vm495, 0.0, %v494
    %497 = vrot.lane.b32.xlu0 %v491, 4
    %v498 = vpop.permute.xlu0 %497
    %v499 = vsel %vm312, 0.0, %v498
    %v500 = vld [vmem:[#allocation2 + $0x70] sm:$0xff]
    %v501 = vld [vmem:[#allocation2 + $0x78] sm:$0xff]
    %v503 = vsel %vm134, %v500, 0
    %v506 = vsel %vm134, %v501, 0
    %508 = vmatprep.subr.mxu0 0.0
    %509 = vmatpush1.msra.mxu0 %v496
    %510 = vmatprep.subr.mxu0 0.0
    %511 = vmatpush1.msra.mxu0 %v499
    %512 = vmatprep.subr.mxu0 0.0
    %513 = vmatpush1.msra.mxu0 %v491
    %514 = vmatprep.subr.mxu0 0.0
    %515 = vmatpush1.msra.mxu0 1.0
    %516 = vmatprep.subr.mxu0 0.0
    %517 = vmatpush1.msra.mxu0 0.0
    %518 = vmatprep.subr.mxu0 0.0
    %519 = vmatpush1.msra.mxu0 0.0
    %520 = vmatprep.subr.mxu0 0.0
    %521 = vmatpush1.msra.mxu0 0.0
    %522 = vmatprep.subr.mxu0 0.0
    %523 = vmatpush1.msra.mxu0 0.0
    %524 = vmatprep.subr.mxu0 0.0
    %525 = vmatpush1.msra.mxu0 0.0
    %526 = vmatprep.subr.mxu0 0.0
    %527 = vmatpush1.msra.mxu0 0.0
    %528 = vmatprep.subr.mxu0 0.0
    %529 = vmatpush1.msra.mxu0 0.0
    %530 = vmatprep.subr.mxu0 0.0
    %531 = vmatpush1.msra.mxu0 0.0
    %532 = vmatprep.subr.mxu0 0.0
    %533 = vmatpush1.msra.mxu0 0.0
    %534 = vmatprep.subr.mxu0 0.0
    %535 = vmatpush1.msra.mxu0 0.0
    %536 = vmatprep.subr.mxu0 0.0
    %537 = vmatpush1.msra.mxu0 0.0
    %538 = vmatprep.subr.mxu0 0.0
    %539 = vmatpush1.msra.mxu0 0.0
    %540 = vmatprep.subr.mxu0 0.0
    %541 = vmatpush1.msra.mxu0 0.0
    %542 = vmatprep.subr.mxu0 0.0
    %543 = vmatpush1.msra.mxu0 0.0
    %544 = vmatprep.subr.mxu0 0.0
    %545 = vmatpush1.msra.mxu0 0.0
    %546 = vmatprep.subr.mxu0 0.0
    %547 = vmatpush1.msra.mxu0 0.0
    %548 = vmatprep.subr.mxu0 0.0
    %549 = vmatpush1.msra.mxu0 0.0
    %550 = vmatprep.subr.mxu0 0.0
    %551 = vmatpush1.msra.mxu0 0.0
    %552 = vmatprep.subr.mxu0 0.0
    %553 = vmatpush1.msra.mxu0 0.0
    %554 = vmatprep.subr.mxu0 0.0
    %555 = vmatpush1.msra.mxu0 0.0
    %556 = vmatprep.subr.mxu0 0.0
    %557 = vmatpush1.msra.mxu0 0.0
    %558 = vmatprep.subr.mxu0 0.0
    %559 = vmatpush1.msra.mxu0 0.0
    %560 = vmatprep.subr.mxu0 0.0
    %561 = vmatpush1.msra.mxu0 0.0
    %562 = vmatprep.subr.mxu0 0.0
    %563 = vmatpush1.msra.mxu0 0.0
    %564 = vmatprep.subr.mxu0 0.0
    %565 = vmatpush1.msra.mxu0 0.0
    %566 = vmatprep.subr.mxu0 0.0
    %567 = vmatpush1.msra.mxu0 0.0
    %568 = vmatprep.subr.mxu0 0.0
    %569 = vmatpush1.msra.mxu0 0.0
    %570 = vmatprep.subr.mxu0 0.0
    %571 = vmatpush1.msra.mxu0 0.0
    %572 = vmatprep.mubr.f32.mxu0 0.0
    %573 = vmatmul.mubr.f32.gmra.mrb[0].mxu0 %v503
    %v574 = vpop.f32.mrb[0].mxu0
    %v575 = vadd.f32 0.0, %v574
    %v576 = vpop.f32.mrb[0].mxu0
    %577 = vmatprep.mubr.f32.mxu0 0.0
    %578 = vmatmul.mubr.f32.gmra.mrb[0].mxu0 %v506
    %v579 = vpop.f32.mrb[0].mxu0
    %v580 = vadd.f32 0.0, %v579
    %v581 = vpop.f32.mrb[0].mxu0
    %582 = vdwg.mxu0
    %v583 = vtanh.pop %v575
    %v584 = vxor.u32 %v580, 2147483648
    %v585 = vmul.f32 %v584, 1.442695
    %v586 = vpow.pop %v585
    %v587 = vadd.f32 %v586, 1.0
    %v588 = vrcp.pop %v587
    %v589 = vmul.f32 1.0, %v588
    %v590 = vmul.f32 %v583, %v589
    %v591 = vld [vmem:[#allocation2 + $0xa0] sm:$0xff]
    %v592 = vld [vmem:[#allocation2 + $0xa8] sm:$0xff]
    %v594 = vsel %vm226, %v591, 0
    %v597 = vsel %vm226, %v592, 0
    %599 = vmatprep.subr.mxu0 0.0
    %600 = vmatpush1.msra.mxu0 %v590
    %601 = vmatprep.subr.mxu0 0.0
    %602 = vmatpush1.msra.mxu0 1.0
    %603 = vmatprep.subr.mxu0 0.0
    %604 = vmatpush1.msra.mxu0 0.0
    %605 = vmatprep.subr.mxu0 0.0
    %606 = vmatpush1.msra.mxu0 0.0
    %607 = vmatprep.subr.mxu0 0.0
    %608 = vmatpush1.msra.mxu0 0.0
    %609 = vmatprep.subr.mxu0 0.0
    %610 = vmatpush1.msra.mxu0 0.0
    %611 = vmatprep.subr.mxu0 0.0
    %612 = vmatpush1.msra.mxu0 0.0
    %613 = vmatprep.subr.mxu0 0.0
    %614 = vmatpush1.msra.mxu0 0.0
    %615 = vmatprep.subr.mxu0 0.0
    %616 = vmatpush1.msra.mxu0 0.0
    %617 = vmatprep.subr.mxu0 0.0
    %618 = vmatpush1.msra.mxu0 0.0
    %619 = vmatprep.subr.mxu0 0.0
    %620 = vmatpush1.msra.mxu0 0.0
    %621 = vmatprep.subr.mxu0 0.0
    %622 = vmatpush1.msra.mxu0 0.0
    %623 = vmatprep.subr.mxu0 0.0
    %624 = vmatpush1.msra.mxu0 0.0
    %625 = vmatprep.subr.mxu0 0.0
    %626 = vmatpush1.msra.mxu0 0.0
    %627 = vmatprep.subr.mxu0 0.0
    %628 = vmatpush1.msra.mxu0 0.0
    %629 = vmatprep.subr.mxu0 0.0
    %630 = vmatpush1.msra.mxu0 0.0
    %631 = vmatprep.subr.mxu0 0.0
    %632 = vmatpush1.msra.mxu0 0.0
    %633 = vmatprep.subr.mxu0 0.0
    %634 = vmatpush1.msra.mxu0 0.0
    %635 = vmatprep.subr.mxu0 0.0
    %636 = vmatpush1.msra.mxu0 0.0
    %637 = vmatprep.subr.mxu0 0.0
    %638 = vmatpush1.msra.mxu0 0.0
    %639 = vmatprep.subr.mxu0 0.0
    %640 = vmatpush1.msra.mxu0 0.0
    %641 = vmatprep.subr.mxu0 0.0
    %642 = vmatpush1.msra.mxu0 0.0
    %643 = vmatprep.subr.mxu0 0.0
    %644 = vmatpush1.msra.mxu0 0.0
    %645 = vmatprep.subr.mxu0 0.0
    %646 = vmatpush1.msra.mxu0 0.0
    %647 = vmatprep.subr.mxu0 0.0
    %648 = vmatpush1.msra.mxu0 0.0
    %649 = vmatprep.subr.mxu0 0.0
    %650 = vmatpush1.msra.mxu0 0.0
    %651 = vmatprep.subr.mxu0 0.0
    %652 = vmatpush1.msra.mxu0 0.0
    %653 = vmatprep.subr.mxu0 0.0
    %654 = vmatpush1.msra.mxu0 0.0
    %655 = vmatprep.subr.mxu0 0.0
    %656 = vmatpush1.msra.mxu0 0.0
    %657 = vmatprep.subr.mxu0 0.0
    %658 = vmatpush1.msra.mxu0 0.0
    %659 = vmatprep.subr.mxu0 0.0
    %660 = vmatpush1.msra.mxu0 0.0
    %661 = vmatprep.subr.mxu0 0.0
    %662 = vmatpush1.msra.mxu0 0.0
    %663 = vmatprep.mubr.f32.mxu0 0.0
    %664 = vmatmul.mubr.f32.gmra.mrb[0].mxu0 %v594
    %v665 = vpop.f32.mrb[0].mxu0
    %v666 = vpop.f32.mrb[0].mxu0
    %667 = vmatprep.mubr.f32.mxu0 0.0
    %668 = vmatmul.mubr.f32.gmra.mrb[0].mxu0 %v597
    %v669 = vpop.f32.mrb[0].mxu0
    %v670 = vadd.f32 0.0, %v669
    %v671 = vpop.f32.mrb[0].mxu0
    %672 = vdwg.mxu0
    %v673 = vadd.f32 %v492, %v670
    %674 = vst [vmem:[%s2] sm:$0xff] %v673
    // Predicated region
    $region14: #{forward.1} parent=1 // pred_check
      _
    $region15: #{forward.1} parent=1 // pred_check_branch
      %676 = sbr.rel (0) target = $region17
    $region16: #{forward.1} parent=1 // pred_region
      _
    $region17: #{forward.1} parent=1 // pred_fallthru
      _
    // Predicated region
    $region18: #{forward.1} parent=1 // pred_check
      _
    $region19: #{forward.1} parent=1 // pred_check_branch
      %678 = sbr.rel (0) target = $region21
    $region20: #{forward.1} parent=1 // pred_region
      _
    $region21: #{forward.1} parent=1 // pred_fallthru
      _
    %679 = vsyncpa [#allocation3], 1

</llo_original>
